<compile_context>
chip_gen: v5e
topology: v5e:2x2
jax: 0.10.0
libtpu: 0.0.40
codegen_flags: <defaults>
</compile_context>

<pallas_src>
import jax
import jax.numpy as jnp
from jax.experimental import pallas as pl
from jax.experimental.pallas import tpu as pltpu

MSE_WEIGHT = 0.7
SC_WEIGHT = 0.3

LANES = 128
SUBLANES = 8
TM_MAX = 8192          # rows per block: 8192*128*4B = 4 MiB per f32 input block
NCORES = 2             # leading "parallel" grid axis (megacore shard on v7x)


def _make_partial_sums_kernel(tm: int, rows: int):
    """Kernel producing per-partition per-lane partial sums of (t-x)^2 and t^2."""

    def kernel(x_ref, t_ref, diff_out_ref, tgt_out_ref, diff_acc, tgt_acc):
        c = pl.program_id(0)          # partition (core) index
        i = pl.program_id(1)          # block index within partition
        bpc = pl.num_programs(1)

        @pl.when(i == 0)
        def _init():
            diff_acc[...] = jnp.zeros_like(diff_acc)
            tgt_acc[...] = jnp.zeros_like(tgt_acc)

        blk = c * bpc + i             # logical block id (may exceed valid range)
        row0 = blk * tm

        x = x_ref[...].astype(jnp.float32)
        t = t_ref[...].astype(jnp.float32)

        def accumulate(xv, tv):
            d = tv - xv
            diff_acc[0:1, :] += jnp.sum(d * d, axis=0, keepdims=True)
            tgt_acc[0:1, :] += jnp.sum(tv * tv, axis=0, keepdims=True)

        is_full = row0 + tm <= rows   # block entirely within the valid rows?

        @pl.when(is_full)
        def _full():
            accumulate(x, t)

        @pl.when(jnp.logical_not(is_full))
        def _partial():
            # Mask rows past the end of the (possibly clamped / out-of-range)
            # block so garbage never enters the sums.
            gid = row0 + jax.lax.broadcasted_iota(jnp.int32, (tm, LANES), 0)
            m = gid < rows
            accumulate(jnp.where(m, x, 0.0), jnp.where(m, t, 0.0))

        @pl.when(i == bpc - 1)
        def _finalize():
            diff_out_ref[...] = diff_acc[...]
            tgt_out_ref[...] = tgt_acc[...]

    return kernel


def combined_loss(inp, tgt):
    assert inp.shape == tgt.shape
    n_elems = inp.size

    x = jnp.ravel(inp)
    t = jnp.ravel(tgt)

    # Pad (with zeros) only when needed so the flat array reshapes to
    # (rows, 128) with rows a multiple of 8.  Zeros add 0 to both sums; the
    # MSE denominator uses the true element count.
    tile = SUBLANES * LANES
    pad = (-n_elems) % tile
    if pad:
        x = jnp.pad(x, (0, pad))
        t = jnp.pad(t, (0, pad))

    rows = (n_elems + pad) // LANES
    x2 = x.reshape(rows, LANES)
    t2 = t.reshape(rows, LANES)

    tm = min(TM_MAX, rows)                 # multiple of 8 (rows is), or full dim
    nblocks = pl.cdiv(rows, tm)
    bpc = pl.cdiv(nblocks, NCORES)         # blocks per partition

    def in_map(c, i):
        # Clamp so the DMA never targets a block past the array; out-of-range
        # logical blocks are fully masked inside the kernel.
        return (jnp.minimum(c * bpc + i, nblocks - 1), 0)

    diff_part, tgt_part = pl.pallas_call(
        _make_partial_sums_kernel(tm, rows),
        out_shape=(
            jax.ShapeDtypeStruct((NCORES * SUBLANES, LANES), jnp.float32),
            jax.ShapeDtypeStruct((NCORES * SUBLANES, LANES), jnp.float32),
        ),
        grid_spec=pltpu.PrefetchScalarGridSpec(
            num_scalar_prefetch=0,
            grid=(NCORES, bpc),
            in_specs=[
                pl.BlockSpec((tm, LANES), in_map),
                pl.BlockSpec((tm, LANES), in_map),
            ],
            out_specs=(
                pl.BlockSpec((SUBLANES, LANES), lambda c, i: (c, 0)),
                pl.BlockSpec((SUBLANES, LANES), lambda c, i: (c, 0)),
            ),
            scratch_shapes=[
                pltpu.VMEM((SUBLANES, LANES), jnp.float32),
                pltpu.VMEM((SUBLANES, LANES), jnp.float32),
            ],
        ),
        compiler_params=pltpu.CompilerParams(
            dimension_semantics=("parallel", "arbitrary"),
            vmem_limit_bytes=40 * 1024 * 1024,
        ),
    )(x2, t2)

    # Tiny final combine (a handful of scalar ops) in plain JAX.
    sq_diff = jnp.sum(diff_part)
    sq_tgt = jnp.sum(tgt_part)
    mse = sq_diff / n_elems
    sc = jnp.sqrt(sq_diff) / jnp.maximum(jnp.sqrt(sq_tgt), 1e-4)
    return MSE_WEIGHT * mse + SC_WEIGHT * sc


def combined_loss_ref(inp, tgt):
    inp = inp.astype(jnp.float32)
    tgt = tgt.astype(jnp.float32)
    mse = jnp.mean((inp - tgt) ** 2)
    sc = jnp.linalg.norm((tgt - inp).ravel()) / jnp.maximum(
        jnp.linalg.norm(tgt.ravel()), 1e-4
    )
    return MSE_WEIGHT * mse + SC_WEIGHT * sc


if __name__ == "__main__":
    key = jax.random.PRNGKey(0)
    k1, k2 = jax.random.split(key)
    # small NCHW-shaped tensors, consistent with a segmentation-style module
    x = jax.random.normal(k1, (2, 4, 16, 16), dtype=jnp.float32)
    t = jax.random.normal(k2, (2, 4, 16, 16), dtype=jnp.float32)

    loss = jax.block_until_ready(combined_loss(x, t))
    ref = jax.block_until_ready(combined_loss_ref(x, t))

    assert jnp.allclose(loss, ref, rtol=1e-5, atol=1e-6), (loss, ref)
    print("KERNEL_OK")
</pallas_src>

<mosaic_0001>
module attributes {stable_mosaic.version = 11 : i64} {
  func.func @kernel(%arg0: i32, %arg1: i32, %arg2: memref<16x128xf32, #tpu.memory_space<vmem>>, %arg3: memref<16x128xf32, #tpu.memory_space<vmem>>, %arg4: memref<8x128xf32, #tpu.memory_space<vmem>>, %arg5: memref<8x128xf32, #tpu.memory_space<vmem>>, %arg6: memref<8x128xf32, #tpu.memory_space<vmem>>, %arg7: memref<8x128xf32, #tpu.memory_space<vmem>>) attributes {dimension_semantics = [#tpu.dimension_semantics<parallel>, #tpu.dimension_semantics<arbitrary>], iteration_bounds = array<i64: 2, 1>, scalar_prefetch = 0 : i64, scratch_operands = 2 : i64, tpu.core_type = #tpu.core_type<tc>, window_params = [{transform_indices = @transform_0, window_bounds = array<i64: 16, 128>}, {transform_indices = @transform_1, window_bounds = array<i64: 16, 128>}, {transform_indices = @transform_2, window_bounds = array<i64: 8, 128>}, {transform_indices = @transform_3, window_bounds = array<i64: 8, 128>}]} {
    %c0_i32 = arith.constant 0 : i32
    %0 = arith.cmpi eq, %arg1, %c0_i32 : i32
    %1 = arith.extui %0 : i1 to i32
    %c0_i32_0 = arith.constant 0 : i32
    %2 = arith.cmpi ne, %1, %c0_i32_0 : i32
    scf.if %2 {
      %cst = arith.constant 0.000000e+00 : f32
      %18 = vector.broadcast %cst : f32 to vector<8x128xf32>
      %c0_10 = arith.constant 0 : index
      %c0_11 = arith.constant 0 : index
      %19 = vector.load %arg6[%c0_10, %c0_11] : memref<8x128xf32, #tpu.memory_space<vmem>>, vector<8x128xf32>
      tpu.vector_store %arg6[%c0_10, %c0_11], %18 {strides = array<i32>} : memref<8x128xf32, #tpu.memory_space<vmem>>, vector<8x128xf32>,
      %cst_12 = arith.constant 0.000000e+00 : f32
      %20 = vector.broadcast %cst_12 : f32 to vector<8x128xf32>
      %c0_13 = arith.constant 0 : index
      %c0_14 = arith.constant 0 : index
      %21 = vector.load %arg7[%c0_13, %c0_14] : memref<8x128xf32, #tpu.memory_space<vmem>>, vector<8x128xf32>
      tpu.vector_store %arg7[%c0_13, %c0_14], %20 {strides = array<i32>} : memref<8x128xf32, #tpu.memory_space<vmem>>, vector<8x128xf32>,
    } else {
    }
    %c1_i32 = arith.constant 1 : i32
    %3 = arith.muli %arg0, %c1_i32 : i32
    %4 = arith.addi %3, %arg1 : i32
    %c16_i32 = arith.constant 16 : i32
    %5 = arith.muli %4, %c16_i32 : i32
    %c0 = arith.constant 0 : index
    %c0_1 = arith.constant 0 : index
    %6 = vector.load %arg2[%c0, %c0_1] : memref<16x128xf32, #tpu.memory_space<vmem>>, vector<16x128xf32>
    %c0_2 = arith.constant 0 : index
    %c0_3 = arith.constant 0 : index
    %7 = vector.load %arg3[%c0_2, %c0_3] : memref<16x128xf32, #tpu.memory_space<vmem>>, vector<16x128xf32>
    %c16_i32_4 = arith.constant 16 : i32
    %8 = arith.addi %5, %c16_i32_4 : i32
    %c16_i32_5 = arith.constant 16 : i32
    %9 = arith.cmpi sle, %8, %c16_i32_5 : i32
    %10 = arith.extui %9 : i1 to i32
    %c0_i32_6 = arith.constant 0 : i32
    %11 = arith.cmpi ne, %10, %c0_i32_6 : i32
    scf.if %11 {
      %18 = arith.subf %7, %6 : vector<16x128xf32>
      %c0_10 = arith.constant 0 : index
      %c0_11 = arith.constant 0 : index
      %19 = vector.load %arg6[%c0_10, %c0_11] : memref<8x128xf32, #tpu.memory_space<vmem>>, vector<1x128xf32>
      %20 = arith.mulf %18, %18 : vector<16x128xf32>
      %cst = arith.constant dense<0.000000e+00> : vector<128xf32>
      %21 = vector.multi_reduction <add>, %20, %cst [0] : vector<16x128xf32> to vector<128xf32>
      %22 = vector.shape_cast %21 : vector<128xf32> to vector<1x128xf32>
      %23 = arith.addf %19, %22 : vector<1x128xf32>
      %c0_12 = arith.constant 0 : index
      %c0_13 = arith.constant 0 : index
      %24 = vector.load %arg6[%c0_12, %c0_13] : memref<8x128xf32, #tpu.memory_space<vmem>>, vector<1x128xf32>
      tpu.vector_store %arg6[%c0_12, %c0_13], %23 {strides = array<i32>} : memref<8x128xf32, #tpu.memory_space<vmem>>, vector<1x128xf32>,
      %c0_14 = arith.constant 0 : index
      %c0_15 = arith.constant 0 : index
      %25 = vector.load %arg7[%c0_14, %c0_15] : memref<8x128xf32, #tpu.memory_space<vmem>>, vector<1x128xf32>
      %26 = arith.mulf %7, %7 : vector<16x128xf32>
      %cst_16 = arith.constant dense<0.000000e+00> : vector<128xf32>
      %27 = vector.multi_reduction <add>, %26, %cst_16 [0] : vector<16x128xf32> to vector<128xf32>
      %28 = vector.shape_cast %27 : vector<128xf32> to vector<1x128xf32>
      %29 = arith.addf %25, %28 : vector<1x128xf32>
      %c0_17 = arith.constant 0 : index
      %c0_18 = arith.constant 0 : index
      %30 = vector.load %arg7[%c0_17, %c0_18] : memref<8x128xf32, #tpu.memory_space<vmem>>, vector<1x128xf32>
      tpu.vector_store %arg7[%c0_17, %c0_18], %29 {strides = array<i32>} : memref<8x128xf32, #tpu.memory_space<vmem>>, vector<1x128xf32>,
    } else {
    }
    %true = arith.constant true
    %12 = arith.xori %9, %true : i1
    %13 = arith.extui %12 : i1 to i32
    %c0_i32_7 = arith.constant 0 : i32
    %14 = arith.cmpi ne, %13, %c0_i32_7 : i32
    scf.if %14 {
      %18 = tpu.iota {dimensions = array<i32: 0>} : vector<16x128xi32>
      %19 = vector.broadcast %5 : i32 to vector<16x128xi32>
      %20 = arith.addi %19, %18 : vector<16x128xi32>
      %c16_i32_10 = arith.constant 16 : i32
      %21 = vector.broadcast %c16_i32_10 : i32 to vector<16x128xi32>
      %22 = arith.cmpi slt, %20, %21 : vector<16x128xi32>
      %cst = arith.constant 0.000000e+00 : f32
      %23 = vector.broadcast %cst : f32 to vector<16x128xf32>
      %24 = arith.select %22, %6, %23 : vector<16x128xi1>, vector<16x128xf32>
      %cst_11 = arith.constant 0.000000e+00 : f32
      %25 = vector.broadcast %cst_11 : f32 to vector<16x128xf32>
      %26 = arith.select %22, %7, %25 : vector<16x128xi1>, vector<16x128xf32>
      %27 = arith.subf %26, %24 : vector<16x128xf32>
      %c0_12 = arith.constant 0 : index
      %c0_13 = arith.constant 0 : index
      %28 = vector.load %arg6[%c0_12, %c0_13] : memref<8x128xf32, #tpu.memory_space<vmem>>, vector<1x128xf32>
      %29 = arith.mulf %27, %27 : vector<16x128xf32>
      %cst_14 = arith.constant dense<0.000000e+00> : vector<128xf32>
      %30 = vector.multi_reduction <add>, %29, %cst_14 [0] : vector<16x128xf32> to vector<128xf32>
      %31 = vector.shape_cast %30 : vector<128xf32> to vector<1x128xf32>
      %32 = arith.addf %28, %31 : vector<1x128xf32>
      %c0_15 = arith.constant 0 : index
      %c0_16 = arith.constant 0 : index
      %33 = vector.load %arg6[%c0_15, %c0_16] : memref<8x128xf32, #tpu.memory_space<vmem>>, vector<1x128xf32>
      tpu.vector_store %arg6[%c0_15, %c0_16], %32 {strides = array<i32>} : memref<8x128xf32, #tpu.memory_space<vmem>>, vector<1x128xf32>,
      %c0_17 = arith.constant 0 : index
      %c0_18 = arith.constant 0 : index
      %34 = vector.load %arg7[%c0_17, %c0_18] : memref<8x128xf32, #tpu.memory_space<vmem>>, vector<1x128xf32>
      %35 = arith.mulf %26, %26 : vector<16x128xf32>
      %cst_19 = arith.constant dense<0.000000e+00> : vector<128xf32>
      %36 = vector.multi_reduction <add>, %35, %cst_19 [0] : vector<16x128xf32> to vector<128xf32>
      %37 = vector.shape_cast %36 : vector<128xf32> to vector<1x128xf32>
      %38 = arith.addf %34, %37 : vector<1x128xf32>
      %c0_20 = arith.constant 0 : index
      %c0_21 = arith.constant 0 : index
      %39 = vector.load %arg7[%c0_20, %c0_21] : memref<8x128xf32, #tpu.memory_space<vmem>>, vector<1x128xf32>
      tpu.vector_store %arg7[%c0_20, %c0_21], %38 {strides = array<i32>} : memref<8x128xf32, #tpu.memory_space<vmem>>, vector<1x128xf32>,
    } else {
    }
    %c0_i32_8 = arith.constant 0 : i32
    %15 = arith.cmpi eq, %arg1, %c0_i32_8 : i32
    %16 = arith.extui %15 : i1 to i32
    %c0_i32_9 = arith.constant 0 : i32
    %17 = arith.cmpi ne, %16, %c0_i32_9 : i32
    scf.if %17 {
      %c0_10 = arith.constant 0 : index
      %c0_11 = arith.constant 0 : index
      %18 = vector.load %arg6[%c0_10, %c0_11] : memref<8x128xf32, #tpu.memory_space<vmem>>, vector<8x128xf32>
      %c0_12 = arith.constant 0 : index
      %c0_13 = arith.constant 0 : index
      %19 = vector.load %arg4[%c0_12, %c0_13] : memref<8x128xf32, #tpu.memory_space<vmem>>, vector<8x128xf32>
      tpu.vector_store %arg4[%c0_12, %c0_13], %18 {strides = array<i32>} : memref<8x128xf32, #tpu.memory_space<vmem>>, vector<8x128xf32>,
      %c0_14 = arith.constant 0 : index
      %c0_15 = arith.constant 0 : index
      %20 = vector.load %arg7[%c0_14, %c0_15] : memref<8x128xf32, #tpu.memory_space<vmem>>, vector<8x128xf32>
      %c0_16 = arith.constant 0 : index
      %c0_17 = arith.constant 0 : index
      %21 = vector.load %arg5[%c0_16, %c0_17] : memref<8x128xf32, #tpu.memory_space<vmem>>, vector<8x128xf32>
      tpu.vector_store %arg5[%c0_16, %c0_17], %20 {strides = array<i32>} : memref<8x128xf32, #tpu.memory_space<vmem>>, vector<8x128xf32>,
    } else {
    }
    return
  }
  func.func @transform_0(%arg0: i32, %arg1: i32) -> (i32, i32) {
    %c1_i32 = arith.constant 1 : i32
    %0 = arith.muli %arg0, %c1_i32 : i32
    %1 = arith.addi %0, %arg1 : i32
    %c0_i32 = arith.constant 0 : i32
    %2 = arith.minsi %1, %c0_i32 : i32
    %c0_i32_0 = arith.constant 0 : i32
    %c0_i32_1 = arith.constant 0 : i32
    return %2, %c0_i32_0 : i32, i32
  }
  func.func @transform_1(%arg0: i32, %arg1: i32) -> (i32, i32) {
    %c1_i32 = arith.constant 1 : i32
    %0 = arith.muli %arg0, %c1_i32 : i32
    %1 = arith.addi %0, %arg1 : i32
    %c0_i32 = arith.constant 0 : i32
    %2 = arith.minsi %1, %c0_i32 : i32
    %c0_i32_0 = arith.constant 0 : i32
    %c0_i32_1 = arith.constant 0 : i32
    return %2, %c0_i32_0 : i32, i32
  }
  func.func @transform_2(%arg0: i32, %arg1: i32) -> (i32, i32) {
    %c0_i32 = arith.constant 0 : i32
    %c0_i32_0 = arith.constant 0 : i32
    return %arg0, %c0_i32 : i32, i32
  }
  func.func @transform_3(%arg0: i32, %arg1: i32) -> (i32, i32) {
    %c0_i32 = arith.constant 0 : i32
    %c0_i32_0 = arith.constant 0 : i32
    return %arg0, %c0_i32 : i32, i32
  }
}

</mosaic_0001>

<llo_original>
// kernel: tpu_custom_call.1
$region0: #{tpu_custom_call.1}
  #allocation0 [shape = 'u32[]', space=smem, size = 0x4, offset = 0x4, fixed_abs, tag = 'smem constant byte address 0x4 - core index']
  #allocation1 [shape = 'u32[72,128]{1,0:T(1,128)}', space=vmem, size = 0x9000, scoped, tag = 'internal scratch']
  #allocation2 [shape = 'f32[8,128]{1,0:T(8,128)}', space=vmem, size = 0x1000, scoped, tag = 'scratch operand']
  #allocation3 [shape = 'f32[8,128]{1,0:T(8,128)}', space=vmem, size = 0x1000, scoped, tag = 'scratch operand']
  %s0 = inlined_call_operand.hbm [shape: f32[16,128], index: 0, kind: input, shape index: {}]
  %s1 = inlined_call_operand.hbm [shape: f32[16,128], index: 1, kind: input, shape index: {}]
  %s2 = inlined_call_operand.hbm [shape: f32[16,128], index: 2, kind: output, shape index: {0}]
  %s3 = inlined_call_operand.hbm [shape: f32[16,128], index: 3, kind: output, shape index: {1}]
  %4 = xla_tuple %s2, %s3
  %s5 = sld [smem:[#allocation0]]
  $region73: #{tpu_custom_call.1} parent=0
    _
  %s7 = ssub.s32 1, %s5
  %s8 = scalar_select 0, %s7, %s5
  $region1: #{tpu_custom_call.1} parent=0
    #allocation4 [shape = 'u8[16384]{0}', space=vmem, size = 0x4000, scoped, tag = 'input window, operand 0']
    #allocation5 [shape = 's32[2]{0}', space=sflag, size = 0x8, scoped, tag = 'scoped memory for tpu_custom_call.1']
    #allocation6 [shape = 's32[2]{0}', space=sflag, size = 0x8, scoped, tag = 'scoped memory for tpu_custom_call.1']
    #allocation7 [shape = 'u8[16384]{0}', space=vmem, size = 0x4000, scoped, tag = 'input window, operand 1']
    #allocation8 [shape = 's32[2]{0}', space=sflag, size = 0x8, scoped, tag = 'scoped memory for tpu_custom_call.1']
    #allocation9 [shape = 'u8[8192]{0}', space=vmem, size = 0x2000, scoped, tag = 'output window, operand 0']
    #allocation10 [shape = 'u8[8192]{0}', space=vmem, size = 0x2000, scoped, tag = 'output window, operand 1']
    #allocation11 [shape = 's32[2]{0}', space=sflag, size = 0x8, scoped, tag = 'scoped memory for tpu_custom_call.1']
    %9 = vsyncpa [#allocation5], 0
    %s10 = scalar_lea.sflag [#allocation5], 1
    %11 = vsyncpa %s10, 0
    %12 = vsyncpa [#allocation8], 0
    %s13 = scalar_lea.sflag [#allocation8], 1
    %14 = vsyncpa %s13, 0
    %15 = vsyncpa [#allocation6], 0
    %s16 = scalar_lea.sflag [#allocation6], 1
    %17 = vsyncpa %s16, 0
    %18 = vsyncpa [#allocation11], 0
    %s19 = scalar_lea.sflag [#allocation11], 1
    %20 = vsyncpa %s19, 0
    loop: start=0, step=1, limit=4
    $region2: #{tpu_custom_call.1} parent=1 // loop_pre_header
      _
    $region3: #{tpu_custom_call.1} parent=1 // loop_header
      %s22 = sphi 0, %s26
      %p23 = scmp.ge.s32.totalorder %s22, 4
      %s29 = sphi 0, %s41
      %s30 = sphi 0, %s37
      %s31 = sphi 0, %s29
      %s32 = sphi 0, %s30
      %s33 = sphi 0, %s31
      %s34 = sphi 0, %s32
      %s50 = sphi 0, %s52
      %s53 = sphi 0, %s50
      %s54 = sphi 0, %s53
      %s70 = sphi 0, %s54
      %s82 = sphi 0, %s84
      %s85 = sphi 0, %s82
      %s86 = sphi 0, %s85
      %s102 = sphi 0, %s86
      %s108 = sphi 0, %s110
      %s111 = sphi 0, %s108
      %s112 = sphi 0, %s111
      %s128 = sphi 0, %s112
      %s134 = sphi 0, %s136
      %s137 = sphi 0, %s134
      %s138 = sphi 0, %s137
      %s154 = sphi 0, %s138
    $region4: #{tpu_custom_call.1} parent=1 // loop_header_branch
      %25 = sbr.rel (%p23) target = $region8
    $region5: #{tpu_custom_call.1} parent=1 // loop_body
      %s27 = ssub.s32 %s22, 1
      %s28 = ssub.s32 %s22, 2
      %s35 = sadd.s32 1, %s30
      %p36 = scmp.ge.s32.totalorder %s35, 1
      %s37 = scalar_select %p36, 0, %s35
      %s38 = sadd.s32 1, %s29
      %s39 = scalar_select %p36, %s38, %s29
      %p40 = scmp.ge.s32.totalorder %s39, 2
      %s41 = scalar_select %p40, 0, %s39
      %s42 = sadd.s32 %s29, %s30
      %p43 = scmp.lt.s32.totalorder %s42, 0
      %s44 = scalar_select %p43, %s42, 0
      %s45 = sadd.s32 %s41, %s37
      %p46 = scmp.lt.s32.totalorder %s45, 0
      %s47 = scalar_select %p46, %s45, 0
      %s48 = ssub.s32 %s44, %s47
      %p49 = scmp.eq.s32.totalorder %s48, 0
      %s51 = sadd.s32 %s50, 1
      %s52 = scalar_select %p49, %s50, %s51
      %p55 = pneg %p49
      %p56 = scmp.eq.s32.totalorder %s22, 1
      %p57 = por %p55, %p56
      %p58 = scmp.ne.s32.totalorder %s50, %s53
      %p59 = scmp.eq.s32.totalorder %s22, 0
      %p60 = por %p58, %p59
      %p61 = scmp.ne.s32.totalorder %s50, %s53
      %p62 = scmp.eq.s32.totalorder %s27, 1
      %p63 = por %p61, %p62
      %p64 = scmp.ne.s32.totalorder %s53, %s54
      %p65 = scmp.eq.s32.totalorder %s27, 0
      %p66 = por %p64, %p65
      %p67 = scmp.ne.s32.totalorder %s53, %s54
      %p68 = scmp.eq.s32.totalorder %s28, 1
      %p69 = por %p67, %p68
      %p71 = scmp.ne.s32.totalorder %s54, %s70
      %p72 = scmp.eq.s32.totalorder %s28, 0
      %p73 = por %p71, %p72
      %s74 = sadd.s32 %s29, %s30
      %p75 = scmp.lt.s32.totalorder %s74, 0
      %s76 = scalar_select %p75, %s74, 0
      %s77 = sadd.s32 %s41, %s37
      %p78 = scmp.lt.s32.totalorder %s77, 0
      %s79 = scalar_select %p78, %s77, 0
      %s80 = ssub.s32 %s76, %s79
      %p81 = scmp.eq.s32.totalorder %s80, 0
      %s83 = sadd.s32 %s82, 1
      %s84 = scalar_select %p81, %s82, %s83
      %p87 = pneg %p81
      %p88 = scmp.eq.s32.totalorder %s22, 1
      %p89 = por %p87, %p88
      %p90 = scmp.ne.s32.totalorder %s82, %s85
      %p91 = scmp.eq.s32.totalorder %s22, 0
      %p92 = por %p90, %p91
      %p93 = scmp.ne.s32.totalorder %s82, %s85
      %p94 = scmp.eq.s32.totalorder %s27, 1
      %p95 = por %p93, %p94
      %p96 = scmp.ne.s32.totalorder %s85, %s86
      %p97 = scmp.eq.s32.totalorder %s27, 0
      %p98 = por %p96, %p97
      %p99 = scmp.ne.s32.totalorder %s85, %s86
      %p100 = scmp.eq.s32.totalorder %s28, 1
      %p101 = por %p99, %p100
      %p103 = scmp.ne.s32.totalorder %s86, %s102
      %p104 = scmp.eq.s32.totalorder %s28, 0
      %p105 = por %p103, %p104
      %s106 = ssub.s32 %s29, %s41
      %p107 = scmp.eq.s32.totalorder %s106, 0
      %s109 = sadd.s32 %s108, 1
      %s110 = scalar_select %p107, %s108, %s109
      %p113 = pneg %p107
      %p114 = scmp.eq.s32.totalorder %s22, 1
      %p115 = por %p113, %p114
      %p116 = scmp.ne.s32.totalorder %s108, %s111
      %p117 = scmp.eq.s32.totalorder %s22, 0
      %p118 = por %p116, %p117
      %p119 = scmp.ne.s32.totalorder %s108, %s111
      %p120 = scmp.eq.s32.totalorder %s27, 1
      %p121 = por %p119, %p120
      %p122 = scmp.ne.s32.totalorder %s111, %s112
      %p123 = scmp.eq.s32.totalorder %s27, 0
      %p124 = por %p122, %p123
      %p125 = scmp.ne.s32.totalorder %s111, %s112
      %p126 = scmp.eq.s32.totalorder %s28, 1
      %p127 = por %p125, %p126
      %p129 = scmp.ne.s32.totalorder %s112, %s128
      %p130 = scmp.eq.s32.totalorder %s28, 0
      %p131 = por %p129, %p130
      %s132 = ssub.s32 %s29, %s41
      %p133 = scmp.eq.s32.totalorder %s132, 0
      %s135 = sadd.s32 %s134, 1
      %s136 = scalar_select %p133, %s134, %s135
      %p139 = pneg %p133
      %p140 = scmp.eq.s32.totalorder %s22, 1
      %p141 = por %p139, %p140
      %p142 = scmp.ne.s32.totalorder %s134, %s137
      %p143 = scmp.eq.s32.totalorder %s22, 0
      %p144 = por %p142, %p143
      %p145 = scmp.ne.s32.totalorder %s134, %s137
      %p146 = scmp.eq.s32.totalorder %s27, 1
      %p147 = por %p145, %p146
      %p148 = scmp.ne.s32.totalorder %s137, %s138
      %p149 = scmp.eq.s32.totalorder %s27, 0
      %p150 = por %p148, %p149
      %p151 = scmp.ne.s32.totalorder %s137, %s138
      %p152 = scmp.eq.s32.totalorder %s28, 1
      %p153 = por %p151, %p152
      %p155 = scmp.ne.s32.totalorder %s138, %s154
      %p156 = scmp.eq.s32.totalorder %s28, 0
      %p157 = por %p155, %p156
      %p158 = scmp.le.s32.totalorder 1, %s22
      %p159 = scmp.lt.s32.totalorder %s22, 3
      %p160 = pnand %p158, %p159
      %p161 = pneg %p160
      // Predicated region
      $region9: #{tpu_custom_call.1} parent=5 // pred_check
        _
      $region10: #{tpu_custom_call.1} parent=5 // pred_check_branch
        %163 = sbr.rel (%p160) target = $region12
      $region11: #{tpu_custom_call.1} parent=5 // pred_region
        %s164 = ssub.s32 %s22, 1
      $region12: #{tpu_custom_call.1} parent=5 // pred_fallthru
        _
      %p165 = scmp.lt.s32.totalorder %s22, 2
      // Predicated region
      $region13: #{tpu_custom_call.1} parent=5 // pred_check
        %p166 = pneg %p165
      $region14: #{tpu_custom_call.1} parent=5 // pred_check_branch
        %168 = sbr.rel (%p166) target = $region16
      $region15: #{tpu_custom_call.1} parent=5 // pred_region
        // Predicated region
        $region17: #{tpu_custom_call.1} parent=15 // pred_check
          %p169 = pneg %p60
        $region18: #{tpu_custom_call.1} parent=15 // pred_check_branch
          %171 = sbr.rel (%p169) target = $region20
        $region19: #{tpu_custom_call.1} parent=15 // pred_region
          %s172 = sand.u32 %s50, 1
          %s173 = scalar_lea.sflag [#allocation5], %s172
          %s174 = sand.u32 %s50, 1
          %s175 = smul.addr %s174, 16
          %s176 = scalar_lea.vmem [#allocation4], %s175
          %s177 = sadd.s32 %s29, %s30
          %p178 = scmp.lt.s32.totalorder %s177, 0
          %s179 = scalar_select %p178, %s177, 0
          %s180 = smul.u32 2, %s179
          %182 = vsyncadd %s173, 0
          %s183 = smul.addr %s180, 8
          %s184 = scalar_lea.hbm %s0, %s183
          %s185 = sshll.u32 %s184, 4
          %s186 = int_to_ptr.hbm [resolvable:$true] %s185
          %s187 = sshll.u32 %s176, 4
          %s188 = int_to_ptr.vmem [resolvable:$true] %s187
          %193 = dma.hbm_to_vmem [thread:$0]  %s186, 256, %s188, %s173, 128, 128, 8
        $region20: #{tpu_custom_call.1} parent=15 // pred_fallthru
          _
        // Predicated region
        $region21: #{tpu_custom_call.1} parent=15 // pred_check
          %p194 = pneg %p92
        $region22: #{tpu_custom_call.1} parent=15 // pred_check_branch
          %196 = sbr.rel (%p194) target = $region24
        $region23: #{tpu_custom_call.1} parent=15 // pred_region
          %s197 = sand.u32 %s82, 1
          %s198 = scalar_lea.sflag [#allocation8], %s197
          %s199 = sand.u32 %s82, 1
          %s200 = smul.addr %s199, 16
          %s201 = scalar_lea.vmem [#allocation7], %s200
          %s202 = sadd.s32 %s29, %s30
          %p203 = scmp.lt.s32.totalorder %s202, 0
          %s204 = scalar_select %p203, %s202, 0
          %s205 = smul.u32 2, %s204
          %207 = vsyncadd %s198, 0
          %s208 = smul.addr %s205, 8
          %s209 = scalar_lea.hbm %s1, %s208
          %s210 = sshll.u32 %s209, 4
          %s211 = int_to_ptr.hbm [resolvable:$true] %s210
          %s212 = sshll.u32 %s201, 4
          %s213 = int_to_ptr.vmem [resolvable:$true] %s212
          %218 = dma.hbm_to_vmem [thread:$0]  %s211, 256, %s213, %s198, 128, 128, 8
        $region24: #{tpu_custom_call.1} parent=15 // pred_fallthru
          _
      $region16: #{tpu_custom_call.1} parent=5 // pred_fallthru
        _
      %p219 = scmp.le.s32.totalorder 1, %s22
      %p220 = scmp.lt.s32.totalorder %s22, 3
      %p221 = pnand %p219, %p220
      %p222 = pneg %p221
      // Predicated region
      $region25: #{tpu_custom_call.1} parent=5 // pred_check
        _
      $region26: #{tpu_custom_call.1} parent=5 // pred_check_branch
        %224 = sbr.rel (%p221) target = $region28
      $region27: #{tpu_custom_call.1} parent=5 // pred_region
        %s225 = ssub.s32 %s22, 1
        %s226 = sand.u32 %s53, 1
        %s227 = scalar_lea.sflag [#allocation5], %s226
        %s228 = sand.u32 %s53, 1
        %s229 = smul.addr %s228, 16
        %s230 = scalar_lea.vmem [#allocation4], %s229
        // Predicated region
        $region29: #{tpu_custom_call.1} parent=27 // pred_check
          %p231 = pneg %p66
        $region30: #{tpu_custom_call.1} parent=27 // pred_check_branch
          %233 = sbr.rel (%p231) target = $region32
        $region31: #{tpu_custom_call.1} parent=27 // pred_region
          %235 = dma.done %s227, 256
        $region32: #{tpu_custom_call.1} parent=27 // pred_fallthru
          _
        %s236 = sand.u32 %s85, 1
        %s237 = scalar_lea.sflag [#allocation8], %s236
        %s238 = sand.u32 %s85, 1
        %s239 = smul.addr %s238, 16
        %s240 = scalar_lea.vmem [#allocation7], %s239
        // Predicated region
        $region33: #{tpu_custom_call.1} parent=27 // pred_check
          %p241 = pneg %p98
        $region34: #{tpu_custom_call.1} parent=27 // pred_check_branch
          %243 = sbr.rel (%p241) target = $region36
        $region35: #{tpu_custom_call.1} parent=27 // pred_region
          %245 = dma.done %s237, 256
        $region36: #{tpu_custom_call.1} parent=27 // pred_fallthru
          _
        %s246 = sand.u32 %s53, 1
        %s247 = scalar_lea.sflag [#allocation5], %s246
        %s248 = sand.u32 %s53, 1
        %s249 = smul.addr %s248, 16
        %s250 = scalar_lea.vmem [#allocation4], %s249
        %p251 = pneg %p66
        %p252 = pneg %p63
        %s253 = sand.u32 %s85, 1
        %s254 = scalar_lea.sflag [#allocation8], %s253
        %s255 = sand.u32 %s85, 1
        %s256 = smul.addr %s255, 16
        %s257 = scalar_lea.vmem [#allocation7], %s256
        %p258 = pneg %p98
        %p259 = pneg %p95
        %p260 = pneg %p124
        %p261 = pneg %p121
        %s262 = sand.u32 %s111, 1
        %s263 = scalar_lea.sflag [#allocation6], %s262
        %s264 = sand.u32 %s111, 1
        %s265 = smul.addr %s264, 8
        %s266 = scalar_lea.vmem [#allocation9], %s265
        %p267 = pneg %p150
        %p268 = pneg %p147
        %s269 = sand.u32 %s137, 1
        %s270 = scalar_lea.sflag [#allocation11], %s269
        %s271 = sand.u32 %s137, 1
        %s272 = smul.addr %s271, 8
        %s273 = scalar_lea.vmem [#allocation10], %s272
        %s274 = sadd.s32 %s31, %s32
        %p275 = scmp.lt.s32.totalorder %s274, 0
        %s276 = scalar_select %p275, %s274, 0
        %s277 = smul.u32 2, %s276
        %s278 = sadd.s32 %s31, %s32
        %p279 = scmp.lt.s32.totalorder %s278, 0
        %s280 = scalar_select %p279, %s278, 0
        %s281 = smul.u32 2, %s280
        %p282 = scmp.eq.s32.totalorder %s32, 0
        // Predicated region
        $region37: #{tpu_custom_call.1} parent=27 // pred_check
          %p283 = pneg %p282
        $region38: #{tpu_custom_call.1} parent=27 // pred_check_branch
          %285 = sbr.rel (%p283) target = $region40
        $region39: #{tpu_custom_call.1} parent=27 // pred_region
          %286 = vst [vmem:[#allocation2] sm:$0xff] 0.0
          %287 = vst [vmem:[#allocation3] sm:$0xff] 0.0
        $region40: #{tpu_custom_call.1} parent=27 // pred_fallthru
          _
        %s288 = sadd.s32 %s31, %s32
        %s289 = smul.u32 %s288, 16
        %v290 = vld [vmem:[%s230] sm:$0xff]
        %v291 = vld [vmem:[%s230 + $0x8] sm:$0xff]
        %v292 = vld [vmem:[%s240] sm:$0xff]
        %v293 = vld [vmem:[%s240 + $0x8] sm:$0xff]
        %s294 = sadd.s32 %s289, 16
        %p295 = scmp.le.s32.totalorder %s294, 16
        // Predicated region
        $region41: #{tpu_custom_call.1} parent=27 // pred_check
          %p296 = pneg %p295
        $region42: #{tpu_custom_call.1} parent=27 // pred_check_branch
          %298 = sbr.rel (%p296) target = $region44
        $region43: #{tpu_custom_call.1} parent=27 // pred_region
          %v299 = vsub.f32 %v292, %v290
          %v300 = vsub.f32 %v293, %v291
          %v301 = vld [vmem:[#allocation2] sm:$0x1]
          %v302 = vmul.f32 %v299, %v299
          %v303 = vmul.f32 %v300, %v300
          %v304 = vadd.f32 %v302, %v303
          %v305 = vrot.slane %v304, 4
          %v306 = vadd.f32 %v304, %v305
          %v307 = vrot.slane %v306, 2
          %v308 = vadd.f32 %v306, %v307
          %v309 = vrot.slane %v308, 1
          %v310 = vadd.f32 %v308, %v309
          %v311 = vadd.f32 %v301, %v310
          %312 = vst [vmem:[#allocation2] sm:$0x1] %v311
          %v313 = vld [vmem:[#allocation3] sm:$0x1]
          %v314 = vmul.f32 %v292, %v292
          %v315 = vmul.f32 %v293, %v293
          %v316 = vadd.f32 %v314, %v315
          %v317 = vrot.slane %v316, 4
          %v318 = vadd.f32 %v316, %v317
          %v319 = vrot.slane %v318, 2
          %v320 = vadd.f32 %v318, %v319
          %v321 = vrot.slane %v320, 1
          %v322 = vadd.f32 %v320, %v321
          %v323 = vadd.f32 %v313, %v322
          %324 = vst [vmem:[#allocation3] sm:$0x1] %v323
        $region44: #{tpu_custom_call.1} parent=27 // pred_fallthru
          _
        %p325 = scmp.gt.s32.totalorder %s294, 16
        // Predicated region
        $region45: #{tpu_custom_call.1} parent=27 // pred_check
          %p326 = pneg %p325
        $region46: #{tpu_custom_call.1} parent=27 // pred_check_branch
          %328 = sbr.rel (%p326) target = $region48
        $region47: #{tpu_custom_call.1} parent=27 // pred_region
          %v329 = vlaneseq
          %v330 = vshrl.u32 %v329, 7
          %v331 = vadd.s32 %v330, 8
          %v332 = vstv %s289
          %v333 = vadd.s32 %v332, %v330
          %v334 = vadd.s32 %v332, %v331
          %vm335 = vcmp.lt.s32.totalorder %v333, 16
          %vm336 = vcmp.lt.s32.totalorder %v334, 16
          %v337 = vsel %vm335, %v290, 0.0
          %v338 = vsel %vm336, %v291, 0.0
          %v339 = vsel %vm335, %v292, 0.0
          %v340 = vsel %vm336, %v293, 0.0
          %v341 = vsub.f32 %v339, %v337
          %v342 = vsub.f32 %v340, %v338
          %v343 = vld [vmem:[#allocation2] sm:$0x1]
          %v344 = vmul.f32 %v341, %v341
          %v345 = vmul.f32 %v342, %v342
          %v346 = vadd.f32 %v344, %v345
          %v347 = vrot.slane %v346, 4
          %v348 = vadd.f32 %v346, %v347
          %v349 = vrot.slane %v348, 2
          %v350 = vadd.f32 %v348, %v349
          %v351 = vrot.slane %v350, 1
          %v352 = vadd.f32 %v350, %v351
          %v353 = vadd.f32 %v343, %v352
          %354 = vst [vmem:[#allocation2] sm:$0x1] %v353
          %v355 = vld [vmem:[#allocation3] sm:$0x1]
          %v356 = vmul.f32 %v339, %v339
          %v357 = vmul.f32 %v340, %v340
          %v358 = vadd.f32 %v356, %v357
          %v359 = vrot.slane %v358, 4
          %v360 = vadd.f32 %v358, %v359
          %v361 = vrot.slane %v360, 2
          %v362 = vadd.f32 %v360, %v361
          %v363 = vrot.slane %v362, 1
          %v364 = vadd.f32 %v362, %v363
          %v365 = vadd.f32 %v355, %v364
          %366 = vst [vmem:[#allocation3] sm:$0x1] %v365
        $region48: #{tpu_custom_call.1} parent=27 // pred_fallthru
          _
        // Predicated region
        $region49: #{tpu_custom_call.1} parent=27 // pred_check
          %p367 = pneg %p282
        $region50: #{tpu_custom_call.1} parent=27 // pred_check_branch
          %369 = sbr.rel (%p367) target = $region52
        $region51: #{tpu_custom_call.1} parent=27 // pred_region
          %v370 = vld [vmem:[#allocation2] sm:$0xff]
          %371 = vst [vmem:[%s266] sm:$0xff] %v370
          %v372 = vld [vmem:[#allocation3] sm:$0xff]
          %373 = vst [vmem:[%s273] sm:$0xff] %v372
        $region52: #{tpu_custom_call.1} parent=27 // pred_fallthru
          _
        %s374 = sand.u32 %s111, 1
        %s375 = scalar_lea.sflag [#allocation6], %s374
        %s376 = sand.u32 %s111, 1
        %s377 = smul.addr %s376, 8
        %s378 = scalar_lea.vmem [#allocation9], %s377
        %s379 = sand.u32 %s137, 1
        %s380 = scalar_lea.sflag [#allocation11], %s379
        %s381 = sand.u32 %s137, 1
        %s382 = smul.addr %s381, 8
        %s383 = scalar_lea.vmem [#allocation10], %s382
        // Predicated region
        $region53: #{tpu_custom_call.1} parent=27 // pred_check
          %p384 = pneg %p121
        $region54: #{tpu_custom_call.1} parent=27 // pred_check_branch
          %386 = sbr.rel (%p384) target = $region56
        $region55: #{tpu_custom_call.1} parent=27 // pred_region
          %388 = vsyncadd %s375, 0
          %s389 = smul.addr %s31, 8
          %s390 = scalar_lea.hbm %s2, %s389
          %s392 = sshll.u32 %s378, 4
          %s393 = int_to_ptr.vmem [resolvable:$true] %s392
          %s394 = sshll.u32 %s390, 4
          %s395 = int_to_ptr.hbm [resolvable:$true] %s394
          %397 = dma.vmem_to_hbm [thread:$0]  %s393, 128, %s395, %s375
        $region56: #{tpu_custom_call.1} parent=27 // pred_fallthru
          _
        // Predicated region
        $region57: #{tpu_custom_call.1} parent=27 // pred_check
          %p398 = pneg %p147
        $region58: #{tpu_custom_call.1} parent=27 // pred_check_branch
          %400 = sbr.rel (%p398) target = $region60
        $region59: #{tpu_custom_call.1} parent=27 // pred_region
          %402 = vsyncadd %s380, 0
          %s403 = smul.addr %s31, 8
          %s404 = scalar_lea.hbm %s3, %s403
          %s406 = sshll.u32 %s383, 4
          %s407 = int_to_ptr.vmem [resolvable:$true] %s406
          %s408 = sshll.u32 %s404, 4
          %s409 = int_to_ptr.hbm [resolvable:$true] %s408
          %411 = dma.vmem_to_hbm [thread:$0]  %s407, 128, %s409, %s380
        $region60: #{tpu_custom_call.1} parent=27 // pred_fallthru
          _
      $region28: #{tpu_custom_call.1} parent=5 // pred_fallthru
        _
      %p412 = scmp.le.s32.totalorder 2, %s22
      // Predicated region
      $region61: #{tpu_custom_call.1} parent=5 // pred_check
        %p413 = pneg %p412
      $region62: #{tpu_custom_call.1} parent=5 // pred_check_branch
        %415 = sbr.rel (%p413) target = $region64
      $region63: #{tpu_custom_call.1} parent=5 // pred_region
        %s416 = ssub.s32 %s22, 2
        // Predicated region
        $region65: #{tpu_custom_call.1} parent=63 // pred_check
          %p417 = pneg %p127
        $region66: #{tpu_custom_call.1} parent=63 // pred_check_branch
          %419 = sbr.rel (%p417) target = $region68
        $region67: #{tpu_custom_call.1} parent=63 // pred_region
          %s420 = sand.u32 %s112, 1
          %s421 = scalar_lea.sflag [#allocation6], %s420
          %s422 = sand.u32 %s112, 1
          %s423 = smul.addr %s422, 8
          %s424 = scalar_lea.vmem [#allocation9], %s423
          %426 = dma.done %s421, 128
        $region68: #{tpu_custom_call.1} parent=63 // pred_fallthru
          _
        // Predicated region
        $region69: #{tpu_custom_call.1} parent=63 // pred_check
          %p427 = pneg %p153
        $region70: #{tpu_custom_call.1} parent=63 // pred_check_branch
          %429 = sbr.rel (%p427) target = $region72
        $region71: #{tpu_custom_call.1} parent=63 // pred_region
          %s430 = sand.u32 %s138, 1
          %s431 = scalar_lea.sflag [#allocation11], %s430
          %s432 = sand.u32 %s138, 1
          %s433 = smul.addr %s432, 8
          %s434 = scalar_lea.vmem [#allocation10], %s433
          %436 = dma.done %s431, 128
        $region72: #{tpu_custom_call.1} parent=63 // pred_fallthru
          _
      $region64: #{tpu_custom_call.1} parent=5 // pred_fallthru
        _
    $region6: #{tpu_custom_call.1} parent=1 // loop_footer
      %s26 = sadd.s32 1, %s22
    $region7: #{tpu_custom_call.1} parent=1 // loop_footer_branch
      %21 = sbr.rel target = $region3
    $region8: #{tpu_custom_call.1} parent=1 // loop_exit
      _
    %437 = vsyncpa [#allocation5], 1
    %s438 = scalar_lea.sflag [#allocation5], 1
    %439 = vsyncpa %s438, 1
    %440 = vsyncpa [#allocation8], 1
    %s441 = scalar_lea.sflag [#allocation8], 1
    %442 = vsyncpa %s441, 1
    %443 = vsyncpa [#allocation6], 1
    %s444 = scalar_lea.sflag [#allocation6], 1
    %445 = vsyncpa %s444, 1
    %446 = vsyncpa [#allocation11], 1
    %s447 = scalar_lea.sflag [#allocation11], 1
    %448 = vsyncpa %s447, 1

</llo_original>
